<compile_context>
chip_gen: v7x
topology: tpu7x:2x2x1
jax: 0.10.0
libtpu: 0.0.40
codegen_flags: <defaults>
</compile_context>

<pallas_src>
import numpy as np
import jax
import jax.numpy as jnp
from jax import lax
from jax.experimental import pallas as pl
from jax.experimental.pallas import tpu as pltpu

EPS = 1e-12


def bert_output_kernel(h_ref, w_ref, b_ref, res_ref, g_ref, beta_ref, o_ref):
    # dense: (tm, I) @ (I, H) -> (tm, H) on the MXU, f32 accumulate
    x = jnp.dot(h_ref[...], w_ref[...], preferred_element_type=jnp.float32)
    x = x + b_ref[...].astype(jnp.float32)           # bias (1, H) broadcast
    # dropout: identity at inference (hidden_dropout_prob only matters in training)
    x = x + res_ref[...].astype(jnp.float32)         # residual add in f32

    # BertLayerNorm (TF style: eps inside the sqrt), f32 stats.
    # Two-pass (mean then centered variance) — matches the torch reference and avoids
    # E[x^2] - E[x]^2 cancellation when |mean| >> std.
    mean = jnp.mean(x, axis=-1, keepdims=True)
    xc = x - mean
    var = jnp.mean(xc * xc, axis=-1, keepdims=True)
    inv_std = lax.rsqrt(var + EPS)                   # EUP rsqrt instead of per-element divide
    y = xc * inv_std
    y = g_ref[...].astype(jnp.float32) * y + beta_ref[...].astype(jnp.float32)
    o_ref[...] = y.astype(o_ref.dtype)


def _round_up(x, m):
    return ((x + m - 1) // m) * m


def bert_output(hidden_states, input_tensor, w, b, gamma, beta, *,
                tm=512, matmul_dtype=jnp.bfloat16, out_dtype=None,
                vmem_budget_bytes=48 * 1024 * 1024):
    """
    hidden_states: (B, S, I)   input_tensor: (B, S, H)
    w: (I, H)  (transpose of torch.nn.Linear.weight which is (H, I))
    b, gamma, beta: (H,)
    tm: target row tile (auto-shrunk to fit vmem_budget_bytes; keep multiples of 128 on v5e).
    matmul_dtype: dtype fed to the MXU for hidden & weight (bf16 default). Residual stays f32.
    out_dtype: output dtype (defaults to input_tensor.dtype; pass bf16 if the consumer accepts it).
    vmem_budget_bytes: double-buffered working-set cap (48 MiB is safe on v7x's 64 MiB VMEM;
                       raise toward ~96 MiB on v5e/v6e for 1024-row tiles).
    """
    B, S, I = hidden_states.shape
    H = input_tensor.shape[-1]
    M = B * S
    if out_dtype is None:
        out_dtype = input_tensor.dtype

    h2 = hidden_states.reshape(M, I)
    r2 = input_tensor.reshape(M, H)          # residual stays in its original (f32) dtype
    if matmul_dtype is not None:
        h2 = h2.astype(matmul_dtype)
        w = w.astype(matmul_dtype)

    b2 = b.reshape(1, H)
    g2 = gamma.reshape(1, H)
    be2 = beta.reshape(1, H)

    # Effective row tile: multiple of 8 sublanes, no bigger than the sublane-rounded row count.
    tm = max(8, _round_up(tm, 8))
    tm_eff = min(tm, _round_up(M, 8))

    # Shrink tm_eff until the (double-buffered) working set fits the VMEM budget.
    def footprint(t):
        per_row = (I * np.dtype(h2.dtype).itemsize        # hidden tile
                   + H * np.dtype(r2.dtype).itemsize      # residual tile
                   + H * np.dtype(out_dtype).itemsize)    # output tile
        resident = I * H * np.dtype(w.dtype).itemsize + 3 * H * 4
        return 2 * (t * per_row + resident)               # default double buffering everywhere
    while tm_eff > 8 and footprint(tm_eff) > vmem_budget_bytes:
        tm_eff = max(8, _round_up(tm_eff // 2, 8))

    # Ragged last tile is masked by Pallas — no jnp.pad / out[:M] slice HBM passes.
    grid = (pl.cdiv(M, tm_eff),)
    vmem_limit = int(min(max(footprint(tm_eff) + (4 << 20), 32 << 20), 100 << 20))

    # TODO(synk): for narrow-H configs (H=128) on v6e/v7x the 256-wide MXU is half-used; real
    # BERT hidden sizes (>=768) fill it, so no row-tile fusion is done here.
    out = pl.pallas_call(
        bert_output_kernel,
        out_shape=jax.ShapeDtypeStruct((M, H), out_dtype),
        grid_spec=pltpu.PrefetchScalarGridSpec(
            num_scalar_prefetch=0,
            grid=grid,
            in_specs=[
                pl.BlockSpec((tm_eff, I), lambda i: (i, 0)),   # hidden rows tile (bf16)
                pl.BlockSpec((I, H), lambda i: (0, 0)),        # full weight (resident, bf16)
                pl.BlockSpec((1, H), lambda i: (0, 0)),        # bias (resident)
                pl.BlockSpec((tm_eff, H), lambda i: (i, 0)),   # residual rows tile (f32)
                pl.BlockSpec((1, H), lambda i: (0, 0)),        # gamma (resident)
                pl.BlockSpec((1, H), lambda i: (0, 0)),        # beta (resident)
            ],
            out_specs=pl.BlockSpec((tm_eff, H), lambda i: (i, 0)),
        ),
        compiler_params=pltpu.CompilerParams(
            dimension_semantics=("parallel",),
            vmem_limit_bytes=vmem_limit,
        ),
    )(h2, w, b2, r2, g2, be2)

    return out.reshape(B, S, H)


def reference(hidden_states, input_tensor, w, b, gamma, beta):
    x = jnp.einsum("bsi,ih->bsh", hidden_states, w) + b
    x = x + input_tensor
    u = jnp.mean(x, axis=-1, keepdims=True)
    s = jnp.mean((x - u) ** 2, axis=-1, keepdims=True)
    xn = (x - u) / jnp.sqrt(s + EPS)
    return gamma * xn + beta


if __name__ == "__main__":
    # config: intermediate_size=512, hidden_size=128 (dropout is identity at inference)
    B, S = 2, 8
    I, H = 512, 128

    key = jax.random.PRNGKey(0)
    k1, k2, k3, k4 = jax.random.split(key, 4)

    hidden_states = jax.random.normal(k1, (B, S, I), dtype=jnp.float32)
    input_tensor = jax.random.normal(k2, (B, S, H), dtype=jnp.float32)

    # nn.Linear(intermediate_size, hidden_size): weight (H, I), bias (H);
    # pass the transpose (I, H) so the kernel does x @ W^T directly.
    w = (jax.random.normal(k3, (H, I), dtype=jnp.float32) * 0.02).T
    b = jax.random.normal(k4, (H,), dtype=jnp.float32) * 0.02
    gamma = jnp.ones((H,), dtype=jnp.float32)   # BertLayerNorm init
    beta = jnp.zeros((H,), dtype=jnp.float32)

    # TODO(synk): nn.Dropout is identity at inference; training-mode stochastic dropout would
    # need pltpu.prng_seed/prng_random_bits inside the kernel with a grid-dependent seed.

    ref = reference(hidden_states, input_tensor, w, b, gamma, beta)

    # Default path: bf16 MXU feeds (hidden + weight), f32 residual / stats / output.
    out = bert_output(hidden_states, input_tensor, w, b, gamma, beta)
    out = jax.block_until_ready(out)
    assert jnp.allclose(out, ref, atol=2e-2, rtol=2e-2), "bf16-matmul mismatch vs reference"

    # Full f32 path (tight tolerance).
    out_f32 = bert_output(hidden_states, input_tensor, w, b, gamma, beta, matmul_dtype=None)
    out_f32 = jax.block_until_ready(out_f32)
    assert jnp.allclose(out_f32, ref, atol=1e-4, rtol=1e-4), "f32 mismatch vs reference"

    # Ragged row count (M not a multiple of the tile): exercises the masked last tile (no pad/slice).
    Sr = 7
    hs_r = hidden_states[:, :Sr]
    it_r = input_tensor[:, :Sr]
    ref_r = reference(hs_r, it_r, w, b, gamma, beta)
    out_r = bert_output(hs_r, it_r, w, b, gamma, beta, matmul_dtype=None)
    out_r = jax.block_until_ready(out_r)
    assert jnp.allclose(out_r, ref_r, atol=1e-4, rtol=1e-4), "ragged-M mismatch vs reference"

    print("KERNEL_OK")
</pallas_src>

<mosaic_0001>
module attributes {stable_mosaic.version = 11 : i64} {
  func.func @bert_output_kernel(%arg0: i32, %arg1: memref<16x512xbf16, #tpu.memory_space<vmem>>, %arg2: memref<512x128xbf16, #tpu.memory_space<vmem>>, %arg3: memref<1x128xf32, #tpu.memory_space<vmem>>, %arg4: memref<16x128xf32, #tpu.memory_space<vmem>>, %arg5: memref<1x128xf32, #tpu.memory_space<vmem>>, %arg6: memref<1x128xf32, #tpu.memory_space<vmem>>, %arg7: memref<16x128xf32, #tpu.memory_space<vmem>>) attributes {dimension_semantics = [#tpu.dimension_semantics<parallel>], iteration_bounds = array<i64: 1>, scalar_prefetch = 0 : i64, scratch_operands = 0 : i64, tpu.core_type = #tpu.core_type<tc>, window_params = [{transform_indices = @transform_0, window_bounds = array<i64: 16, 512>}, {pipeline_mode = #tpu.pipeline_mode<synchronous>, transform_indices = @transform_1, window_bounds = array<i64: 512, 128>}, {pipeline_mode = #tpu.pipeline_mode<synchronous>, transform_indices = @transform_2, window_bounds = array<i64: 1, 128>}, {transform_indices = @transform_3, window_bounds = array<i64: 16, 128>}, {pipeline_mode = #tpu.pipeline_mode<synchronous>, transform_indices = @transform_4, window_bounds = array<i64: 1, 128>}, {pipeline_mode = #tpu.pipeline_mode<synchronous>, transform_indices = @transform_5, window_bounds = array<i64: 1, 128>}, {transform_indices = @transform_6, window_bounds = array<i64: 16, 128>}]} {
    %c0 = arith.constant 0 : index
    %c0_0 = arith.constant 0 : index
    %0 = vector.load %arg1[%c0, %c0_0] : memref<16x512xbf16, #tpu.memory_space<vmem>>, vector<16x512xbf16>
    %c0_1 = arith.constant 0 : index
    %c0_2 = arith.constant 0 : index
    %1 = vector.load %arg2[%c0_1, %c0_2] : memref<512x128xbf16, #tpu.memory_space<vmem>>, vector<512x128xbf16>
    %cst = arith.constant dense<0.000000e+00> : vector<16x128xf32>
    %2 = tpu.matmul %0, %1, %cst {dimension_numbers = #tpu.dot_dimension_numbers<[1], [0], [0], [1], [0, 0, 1, 1], [], []>} : vector<16x512xbf16>, vector<512x128xbf16>, vector<16x128xf32> -> vector<16x128xf32>
    %c0_3 = arith.constant 0 : index
    %c0_4 = arith.constant 0 : index
    %3 = vector.load %arg3[%c0_3, %c0_4] : memref<1x128xf32, #tpu.memory_space<vmem>>, vector<1x128xf32>
    %4 = vector.broadcast %3 : vector<1x128xf32> to vector<16x128xf32>
    %5 = arith.addf %2, %4 : vector<16x128xf32>
    %c0_5 = arith.constant 0 : index
    %c0_6 = arith.constant 0 : index
    %6 = vector.load %arg4[%c0_5, %c0_6] : memref<16x128xf32, #tpu.memory_space<vmem>>, vector<16x128xf32>
    %7 = arith.addf %5, %6 : vector<16x128xf32>
    %cst_7 = arith.constant dense<0.000000e+00> : vector<16xf32>
    %8 = vector.multi_reduction <add>, %7, %cst_7 [1] : vector<16x128xf32> to vector<16xf32>
    %9 = vector.shape_cast %8 : vector<16xf32> to vector<16x1xf32>
    %cst_8 = arith.constant 1.280000e+02 : f32
    %10 = vector.broadcast %cst_8 : f32 to vector<16x1xf32>
    %11 = arith.divf %9, %10 : vector<16x1xf32>
    %12 = vector.broadcast %11 : vector<16x1xf32> to vector<16x128xf32>
    %13 = arith.subf %7, %12 : vector<16x128xf32>
    %14 = arith.mulf %13, %13 : vector<16x128xf32>
    %cst_9 = arith.constant dense<0.000000e+00> : vector<16xf32>
    %15 = vector.multi_reduction <add>, %14, %cst_9 [1] : vector<16x128xf32> to vector<16xf32>
    %16 = vector.shape_cast %15 : vector<16xf32> to vector<16x1xf32>
    %cst_10 = arith.constant 1.280000e+02 : f32
    %17 = vector.broadcast %cst_10 : f32 to vector<16x1xf32>
    %18 = arith.divf %16, %17 : vector<16x1xf32>
    %cst_11 = arith.constant 9.99999996E-13 : f32
    %19 = vector.broadcast %cst_11 : f32 to vector<16x1xf32>
    %20 = arith.addf %18, %19 : vector<16x1xf32>
    %21 = math.rsqrt %20 : vector<16x1xf32>
    %22 = vector.broadcast %21 : vector<16x1xf32> to vector<16x128xf32>
    %23 = arith.mulf %13, %22 : vector<16x128xf32>
    %c0_12 = arith.constant 0 : index
    %c0_13 = arith.constant 0 : index
    %24 = vector.load %arg5[%c0_12, %c0_13] : memref<1x128xf32, #tpu.memory_space<vmem>>, vector<1x128xf32>
    %25 = vector.broadcast %24 : vector<1x128xf32> to vector<16x128xf32>
    %26 = arith.mulf %25, %23 : vector<16x128xf32>
    %c0_14 = arith.constant 0 : index
    %c0_15 = arith.constant 0 : index
    %27 = vector.load %arg6[%c0_14, %c0_15] : memref<1x128xf32, #tpu.memory_space<vmem>>, vector<1x128xf32>
    %28 = vector.broadcast %27 : vector<1x128xf32> to vector<16x128xf32>
    %29 = arith.addf %26, %28 : vector<16x128xf32>
    %c0_16 = arith.constant 0 : index
    %c0_17 = arith.constant 0 : index
    %30 = vector.load %arg7[%c0_16, %c0_17] : memref<16x128xf32, #tpu.memory_space<vmem>>, vector<16x128xf32>
    tpu.vector_store %arg7[%c0_16, %c0_17], %29 {strides = array<i32>} : memref<16x128xf32, #tpu.memory_space<vmem>>, vector<16x128xf32>,
    return
  }
  func.func @transform_0(%arg0: i32) -> (i32, i32) {
    %c0_i32 = arith.constant 0 : i32
    %c0_i32_0 = arith.constant 0 : i32
    return %arg0, %c0_i32 : i32, i32
  }
  func.func @transform_1(%arg0: i32) -> (i32, i32) {
    %c0_i32 = arith.constant 0 : i32
    %c0_i32_0 = arith.constant 0 : i32
    %c0_i32_1 = arith.constant 0 : i32
    return %c0_i32, %c0_i32_0 : i32, i32
  }
  func.func @transform_2(%arg0: i32) -> (i32, i32) {
    %c0_i32 = arith.constant 0 : i32
    %c0_i32_0 = arith.constant 0 : i32
    %c0_i32_1 = arith.constant 0 : i32
    return %c0_i32, %c0_i32_0 : i32, i32
  }
  func.func @transform_3(%arg0: i32) -> (i32, i32) {
    %c0_i32 = arith.constant 0 : i32
    %c0_i32_0 = arith.constant 0 : i32
    return %arg0, %c0_i32 : i32, i32
  }
  func.func @transform_4(%arg0: i32) -> (i32, i32) {
    %c0_i32 = arith.constant 0 : i32
    %c0_i32_0 = arith.constant 0 : i32
    %c0_i32_1 = arith.constant 0 : i32
    return %c0_i32, %c0_i32_0 : i32, i32
  }
  func.func @transform_5(%arg0: i32) -> (i32, i32) {
    %c0_i32 = arith.constant 0 : i32
    %c0_i32_0 = arith.constant 0 : i32
    %c0_i32_1 = arith.constant 0 : i32
    return %c0_i32, %c0_i32_0 : i32, i32
  }
  func.func @transform_6(%arg0: i32) -> (i32, i32) {
    %c0_i32 = arith.constant 0 : i32
    %c0_i32_0 = arith.constant 0 : i32
    return %arg0, %c0_i32 : i32, i32
  }
}

</mosaic_0001>

<llo_original>
// kernel: tpu_custom_call.1
$region0: #{tpu_custom_call.1}
  #allocation0 [shape = 'u32[]', space=smem, size = 0x4, offset = 0x4, fixed_abs, tag = 'smem constant byte address 0x4 - core index']
  #allocation1 [shape = 'u32[144,128]{1,0:T(1,128)}', space=vmem, size = 0x12000, scoped, tag = 'internal scratch']
  %s0 = inlined_call_operand.hbm [shape: bf16[16,512], index: 0, kind: input, shape index: {}]
  %s1 = inlined_call_operand.hbm [shape: bf16[512,128], index: 1, kind: input, shape index: {}]
  %s2 = inlined_call_operand.vmem [shape: f32[1,128], index: 2, kind: input, shape index: {}]
  %s3 = inlined_call_operand.hbm [shape: f32[16,128], index: 3, kind: input, shape index: {}]
  %s4 = inlined_call_operand.vmem [shape: f32[1,128], index: 4, kind: input, shape index: {}]
  %s5 = inlined_call_operand.vmem [shape: f32[1,128], index: 5, kind: input, shape index: {}]
  %s6 = inlined_call_operand.hbm [shape: f32[16,128], index: 6, kind: output, shape index: {}]
  %s7 = sld [smem:[#allocation0]]
  $region46: #{tpu_custom_call.1} parent=0
    _
  %s9 = ssub.s32 1, %s7
  %s10 = scalar_select 0, %s9, %s7
  $region1: #{tpu_custom_call.1} parent=0
    #allocation2 [shape = 'u8[16384]{0}', space=vmem, size = 0x4000, scoped, tag = 'input window, operand 0, single buffered']
    #allocation3 [shape = 's32[1]{0}', space=sflag, size = 0x4, scoped, tag = 'scoped memory for tpu_custom_call.1']
    #allocation4 [shape = 's32[1]{0}', space=sflag, size = 0x4, scoped, tag = 'scoped memory for tpu_custom_call.1']
    #allocation5 [shape = 'u8[131072]{0}', space=vmem, size = 0x20000, scoped, tag = 'input window, operand 1, single buffered']
    #allocation6 [shape = 's32[1]{0}', space=sflag, size = 0x4, scoped, tag = 'scoped memory for tpu_custom_call.1']
    #allocation7 [shape = 'u8[8192]{0}', space=vmem, size = 0x2000, scoped, tag = 'input window, operand 3, single buffered']
    #allocation8 [shape = 'u8[8192]{0}', space=vmem, size = 0x2000, scoped, tag = 'output window, operand 0, single buffered']
    %11 = vsyncpa [#allocation3], 0
    %12 = vsyncpa [#allocation6], 0
    %13 = vsyncpa [#allocation4], 0
    // Predicated region
    $region2: #{tpu_custom_call.1} parent=1 // pred_check
      _
    $region3: #{tpu_custom_call.1} parent=1 // pred_check_branch
      %15 = sbr.rel (0) target = $region5
    $region4: #{tpu_custom_call.1} parent=1 // pred_region
      %s17 = ssub.s32 512, 512
      %18 = vsyncadd [#allocation3], %s17
      %s19 = sshll.u32 [#allocation2], 4
      %s20 = int_to_ptr.vmem [resolvable:$true] %s19
      %25 = dma.hbm_to_vmem [thread:$0]  %s0, 512, %s20, [#allocation3], 256, 256, 16
    $region5: #{tpu_custom_call.1} parent=1 // pred_fallthru
      _
    // Predicated region
    $region6: #{tpu_custom_call.1} parent=1 // pred_check
      _
    $region7: #{tpu_custom_call.1} parent=1 // pred_check_branch
      %27 = sbr.rel (0) target = $region9
    $region8: #{tpu_custom_call.1} parent=1 // pred_region
      %s29 = ssub.s32 4096, 4096
      %30 = vsyncadd [#allocation6], %s29
      %s31 = sshll.u32 [#allocation5], 4
      %s32 = int_to_ptr.vmem [resolvable:$true] %s31
      %37 = dma.hbm_to_vmem [thread:$0]  %s1, 4096, %s32, [#allocation6], 64, 64, 4
    $region9: #{tpu_custom_call.1} parent=1 // pred_fallthru
      _
    // Predicated region
    $region10: #{tpu_custom_call.1} parent=1 // pred_check
      _
    $region11: #{tpu_custom_call.1} parent=1 // pred_check_branch
      %39 = sbr.rel (0) target = $region13
    $region12: #{tpu_custom_call.1} parent=1 // pred_region
      _
    $region13: #{tpu_custom_call.1} parent=1 // pred_fallthru
      _
    // Predicated region
    $region14: #{tpu_custom_call.1} parent=1 // pred_check
      _
    $region15: #{tpu_custom_call.1} parent=1 // pred_check_branch
      %41 = sbr.rel (0) target = $region17
    $region16: #{tpu_custom_call.1} parent=1 // pred_region
      %s43 = ssub.s32 256, 256
      %44 = vsyncadd [#allocation6], %s43
      %s45 = sshll.u32 [#allocation7], 4
      %s46 = int_to_ptr.vmem [resolvable:$true] %s45
      %51 = dma.hbm_to_vmem [thread:$0]  %s3, 256, %s46, [#allocation6], 128, 128, 8
    $region17: #{tpu_custom_call.1} parent=1 // pred_fallthru
      _
    // Predicated region
    $region18: #{tpu_custom_call.1} parent=1 // pred_check
      _
    $region19: #{tpu_custom_call.1} parent=1 // pred_check_branch
      %53 = sbr.rel (0) target = $region21
    $region20: #{tpu_custom_call.1} parent=1 // pred_region
      _
    $region21: #{tpu_custom_call.1} parent=1 // pred_fallthru
      _
    // Predicated region
    $region22: #{tpu_custom_call.1} parent=1 // pred_check
      _
    $region23: #{tpu_custom_call.1} parent=1 // pred_check_branch
      %55 = sbr.rel (0) target = $region25
    $region24: #{tpu_custom_call.1} parent=1 // pred_region
      _
    $region25: #{tpu_custom_call.1} parent=1 // pred_fallthru
      _
    // Predicated region
    $region26: #{tpu_custom_call.1} parent=1 // pred_check
      _
    $region27: #{tpu_custom_call.1} parent=1 // pred_check_branch
      %57 = sbr.rel (0) target = $region29
    $region28: #{tpu_custom_call.1} parent=1 // pred_region
      %58 = dma.done [#allocation3], 512
    $region29: #{tpu_custom_call.1} parent=1 // pred_fallthru
      _
    // Predicated region
    $region30: #{tpu_custom_call.1} parent=1 // pred_check
      _
    $region31: #{tpu_custom_call.1} parent=1 // pred_check_branch
      %60 = sbr.rel (0) target = $region33
    $region32: #{tpu_custom_call.1} parent=1 // pred_region
      %61 = dma.done [#allocation6], 4096
    $region33: #{tpu_custom_call.1} parent=1 // pred_fallthru
      _
    // Predicated region
    $region34: #{tpu_custom_call.1} parent=1 // pred_check
      _
    $region35: #{tpu_custom_call.1} parent=1 // pred_check_branch
      %63 = sbr.rel (0) target = $region37
    $region36: #{tpu_custom_call.1} parent=1 // pred_region
      %64 = dma.done [#allocation6], 256
    $region37: #{tpu_custom_call.1} parent=1 // pred_fallthru
      _
    %v66 = vld [vmem:[#allocation2] sm:$0xff]
    %v67 = vld [vmem:[#allocation2 + $0x8] sm:$0xff]
    %v68 = vld [vmem:[#allocation2 + $0x10] sm:$0xff]
    %v69 = vld [vmem:[#allocation2 + $0x18] sm:$0xff]
    %v70 = vld [vmem:[#allocation5] sm:$0xf]
    %v71 = vld [vmem:[#allocation5 + $0x4] sm:$0xf]
    %v72 = vld [vmem:[#allocation5 + $0x8] sm:$0xf]
    %v73 = vld [vmem:[#allocation5 + $0xc] sm:$0xf]
    %v74 = vld [vmem:[#allocation5 + $0x10] sm:$0xf]
    %v75 = vld [vmem:[#allocation5 + $0x14] sm:$0xf]
    %v76 = vld [vmem:[#allocation5 + $0x18] sm:$0xf]
    %v77 = vld [vmem:[#allocation5 + $0x1c] sm:$0xf]
    %v78 = vld [vmem:[#allocation5 + $0x20] sm:$0xf]
    %v79 = vld [vmem:[#allocation5 + $0x24] sm:$0xf]
    %v80 = vld [vmem:[#allocation5 + $0x28] sm:$0xf]
    %v81 = vld [vmem:[#allocation5 + $0x2c] sm:$0xf]
    %v82 = vld [vmem:[#allocation5 + $0x30] sm:$0xf]
    %v83 = vld [vmem:[#allocation5 + $0x34] sm:$0xf]
    %v84 = vld [vmem:[#allocation5 + $0x38] sm:$0xf]
    %v85 = vld [vmem:[#allocation5 + $0x3c] sm:$0xf]
    %v86 = vld [vmem:[#allocation5 + $0x40] sm:$0xf]
    %v87 = vld [vmem:[#allocation5 + $0x44] sm:$0xf]
    %v88 = vld [vmem:[#allocation5 + $0x48] sm:$0xf]
    %v89 = vld [vmem:[#allocation5 + $0x4c] sm:$0xf]
    %v90 = vld [vmem:[#allocation5 + $0x50] sm:$0xf]
    %v91 = vld [vmem:[#allocation5 + $0x54] sm:$0xf]
    %v92 = vld [vmem:[#allocation5 + $0x58] sm:$0xf]
    %v93 = vld [vmem:[#allocation5 + $0x5c] sm:$0xf]
    %v94 = vld [vmem:[#allocation5 + $0x60] sm:$0xf]
    %v95 = vld [vmem:[#allocation5 + $0x64] sm:$0xf]
    %v96 = vld [vmem:[#allocation5 + $0x68] sm:$0xf]
    %v97 = vld [vmem:[#allocation5 + $0x6c] sm:$0xf]
    %v98 = vld [vmem:[#allocation5 + $0x70] sm:$0xf]
    %v99 = vld [vmem:[#allocation5 + $0x74] sm:$0xf]
    %v100 = vld [vmem:[#allocation5 + $0x78] sm:$0xf]
    %v101 = vld [vmem:[#allocation5 + $0x7c] sm:$0xf]
    %v102 = vld [vmem:[#allocation5 + $0x80] sm:$0xf]
    %v103 = vld [vmem:[#allocation5 + $0x84] sm:$0xf]
    %v104 = vld [vmem:[#allocation5 + $0x88] sm:$0xf]
    %v105 = vld [vmem:[#allocation5 + $0x8c] sm:$0xf]
    %v106 = vld [vmem:[#allocation5 + $0x90] sm:$0xf]
    %v107 = vld [vmem:[#allocation5 + $0x94] sm:$0xf]
    %v108 = vld [vmem:[#allocation5 + $0x98] sm:$0xf]
    %v109 = vld [vmem:[#allocation5 + $0x9c] sm:$0xf]
    %v110 = vld [vmem:[#allocation5 + $0xa0] sm:$0xf]
    %v111 = vld [vmem:[#allocation5 + $0xa4] sm:$0xf]
    %v112 = vld [vmem:[#allocation5 + $0xa8] sm:$0xf]
    %v113 = vld [vmem:[#allocation5 + $0xac] sm:$0xf]
    %v114 = vld [vmem:[#allocation5 + $0xb0] sm:$0xf]
    %v115 = vld [vmem:[#allocation5 + $0xb4] sm:$0xf]
    %v116 = vld [vmem:[#allocation5 + $0xb8] sm:$0xf]
    %v117 = vld [vmem:[#allocation5 + $0xbc] sm:$0xf]
    %v118 = vld [vmem:[#allocation5 + $0xc0] sm:$0xf]
    %v119 = vld [vmem:[#allocation5 + $0xc4] sm:$0xf]
    %v120 = vld [vmem:[#allocation5 + $0xc8] sm:$0xf]
    %v121 = vld [vmem:[#allocation5 + $0xcc] sm:$0xf]
    %v122 = vld [vmem:[#allocation5 + $0xd0] sm:$0xf]
    %v123 = vld [vmem:[#allocation5 + $0xd4] sm:$0xf]
    %v124 = vld [vmem:[#allocation5 + $0xd8] sm:$0xf]
    %v125 = vld [vmem:[#allocation5 + $0xdc] sm:$0xf]
    %v126 = vld [vmem:[#allocation5 + $0xe0] sm:$0xf]
    %v127 = vld [vmem:[#allocation5 + $0xe4] sm:$0xf]
    %v128 = vld [vmem:[#allocation5 + $0xe8] sm:$0xf]
    %v129 = vld [vmem:[#allocation5 + $0xec] sm:$0xf]
    %v130 = vld [vmem:[#allocation5 + $0xf0] sm:$0xf]
    %v131 = vld [vmem:[#allocation5 + $0xf4] sm:$0xf]
    %v132 = vld [vmem:[#allocation5 + $0xf8] sm:$0xf]
    %v133 = vld [vmem:[#allocation5 + $0xfc] sm:$0xf]
    %v134 = vld [vmem:[%s2] sm:$0x1]
    %v136 = vlaneseq
    %v137 = vshrl.u32 %v136, 7
    %v138 = vsub.s32 0, %v137
    %v139 = vrot.slane %v134, %v138
    %v145 = vunpack.c.l.b16 %v66
    %v146 = vunpack.c.h.b16 %v66
    %v147 = vunpack.c.l.b16 %v67
    %v148 = vunpack.c.h.b16 %v67
    %v149 = vunpack.c.l.b16 %v68
    %v150 = vunpack.c.h.b16 %v68
    %v151 = vunpack.c.l.b16 %v69
    %v152 = vunpack.c.h.b16 %v69
    %v153 = vpack.c.b16 %v149, %v145
    %v154 = vpack.c.b16 %v150, %v146
    %v155 = vpack.c.b16 %v151, %v147
    %v156 = vpack.c.b16 %v152, %v148
    %v225 = vunpack.c.l.b16 %v70
    %v226 = vunpack.c.l.b16 %v71
    %v227 = vunpack.c.l.b16 %v72
    %v228 = vunpack.c.l.b16 %v73
    %v229 = vunpack.c.l.b16 %v74
    %v230 = vunpack.c.l.b16 %v75
    %v231 = vunpack.c.l.b16 %v76
    %v232 = vunpack.c.l.b16 %v77
    %v233 = vunpack.c.l.b16 %v78
    %v234 = vunpack.c.l.b16 %v79
    %v235 = vunpack.c.l.b16 %v80
    %v236 = vunpack.c.l.b16 %v81
    %v237 = vunpack.c.l.b16 %v82
    %v238 = vunpack.c.l.b16 %v83
    %v239 = vunpack.c.l.b16 %v84
    %v240 = vunpack.c.l.b16 %v85
    %v241 = vunpack.c.l.b16 %v86
    %v242 = vunpack.c.l.b16 %v87
    %v243 = vunpack.c.l.b16 %v88
    %v244 = vunpack.c.l.b16 %v89
    %v245 = vunpack.c.l.b16 %v90
    %v246 = vunpack.c.l.b16 %v91
    %v247 = vunpack.c.l.b16 %v92
    %v248 = vunpack.c.l.b16 %v93
    %v249 = vunpack.c.l.b16 %v94
    %v250 = vunpack.c.l.b16 %v95
    %v251 = vunpack.c.l.b16 %v96
    %v252 = vunpack.c.l.b16 %v97
    %v253 = vunpack.c.l.b16 %v98
    %v254 = vunpack.c.l.b16 %v99
    %v255 = vunpack.c.l.b16 %v100
    %v256 = vunpack.c.l.b16 %v101
    %v257 = vunpack.c.l.b16 %v102
    %v258 = vunpack.c.l.b16 %v103
    %v259 = vunpack.c.l.b16 %v104
    %v260 = vunpack.c.l.b16 %v105
    %v261 = vunpack.c.l.b16 %v106
    %v262 = vunpack.c.l.b16 %v107
    %v263 = vunpack.c.l.b16 %v108
    %v264 = vunpack.c.l.b16 %v109
    %v265 = vunpack.c.l.b16 %v110
    %v266 = vunpack.c.l.b16 %v111
    %v267 = vunpack.c.l.b16 %v112
    %v268 = vunpack.c.l.b16 %v113
    %v269 = vunpack.c.l.b16 %v114
    %v270 = vunpack.c.l.b16 %v115
    %v271 = vunpack.c.l.b16 %v116
    %v272 = vunpack.c.l.b16 %v117
    %v273 = vunpack.c.l.b16 %v118
    %v274 = vunpack.c.l.b16 %v119
    %v275 = vunpack.c.l.b16 %v120
    %v276 = vunpack.c.l.b16 %v121
    %v277 = vunpack.c.l.b16 %v122
    %v278 = vunpack.c.l.b16 %v123
    %v279 = vunpack.c.l.b16 %v124
    %v280 = vunpack.c.l.b16 %v125
    %v281 = vunpack.c.l.b16 %v126
    %v282 = vunpack.c.l.b16 %v127
    %v283 = vunpack.c.l.b16 %v128
    %v284 = vunpack.c.l.b16 %v129
    %v285 = vunpack.c.l.b16 %v130
    %v286 = vunpack.c.l.b16 %v131
    %v287 = vunpack.c.l.b16 %v132
    %v288 = vunpack.c.l.b16 %v133
    %v289 = vpack.c.b16 %v226, %v225
    %v290 = vpack.c.b16 %v228, %v227
    %v291 = vpack.c.b16 %v230, %v229
    %v292 = vpack.c.b16 %v232, %v231
    %v293 = vpack.c.b16 %v234, %v233
    %v294 = vpack.c.b16 %v236, %v235
    %v295 = vpack.c.b16 %v238, %v237
    %v296 = vpack.c.b16 %v240, %v239
    %v297 = vpack.c.b16 %v242, %v241
    %v298 = vpack.c.b16 %v244, %v243
    %v299 = vpack.c.b16 %v246, %v245
    %v300 = vpack.c.b16 %v248, %v247
    %v301 = vpack.c.b16 %v250, %v249
    %v302 = vpack.c.b16 %v252, %v251
    %v303 = vpack.c.b16 %v254, %v253
    %v304 = vpack.c.b16 %v256, %v255
    %v305 = vpack.c.b16 %v258, %v257
    %v306 = vpack.c.b16 %v260, %v259
    %v307 = vpack.c.b16 %v262, %v261
    %v308 = vpack.c.b16 %v264, %v263
    %v309 = vpack.c.b16 %v266, %v265
    %v310 = vpack.c.b16 %v268, %v267
    %v311 = vpack.c.b16 %v270, %v269
    %v312 = vpack.c.b16 %v272, %v271
    %v313 = vpack.c.b16 %v274, %v273
    %v314 = vpack.c.b16 %v276, %v275
    %v315 = vpack.c.b16 %v278, %v277
    %v316 = vpack.c.b16 %v280, %v279
    %v317 = vpack.c.b16 %v282, %v281
    %v318 = vpack.c.b16 %v284, %v283
    %v319 = vpack.c.b16 %v286, %v285
    %v320 = vpack.c.b16 %v288, %v287
    %353 = vmatprep.subr.bf16.mxu0 0
    %354 = vmatpush1.bf16.msra.mxu0 %v289
    %355 = vmatprep.subr.bf16.mxu0 0
    %356 = vmatpush1.bf16.msra.mxu0 %v290
    %357 = vmatprep.subr.bf16.mxu0 0
    %358 = vmatpush1.bf16.msra.mxu0 %v291
    %359 = vmatprep.subr.bf16.mxu0 0
    %360 = vmatpush1.bf16.msra.mxu0 %v292
    %361 = vmatprep.subr.bf16.mxu0 0
    %362 = vmatpush1.bf16.msra.mxu0 %v293
    %363 = vmatprep.subr.bf16.mxu0 0
    %364 = vmatpush1.bf16.msra.mxu0 %v294
    %365 = vmatprep.subr.bf16.mxu0 0
    %366 = vmatpush1.bf16.msra.mxu0 %v295
    %367 = vmatprep.subr.bf16.mxu0 0
    %368 = vmatpush1.bf16.msra.mxu0 %v296
    %369 = vmatprep.subr.bf16.mxu0 0
    %370 = vmatpush1.bf16.msra.mxu0 %v297
    %371 = vmatprep.subr.bf16.mxu0 0
    %372 = vmatpush1.bf16.msra.mxu0 %v298
    %373 = vmatprep.subr.bf16.mxu0 0
    %374 = vmatpush1.bf16.msra.mxu0 %v299
    %375 = vmatprep.subr.bf16.mxu0 0
    %376 = vmatpush1.bf16.msra.mxu0 %v300
    %377 = vmatprep.subr.bf16.mxu0 0
    %378 = vmatpush1.bf16.msra.mxu0 %v301
    %379 = vmatprep.subr.bf16.mxu0 0
    %380 = vmatpush1.bf16.msra.mxu0 %v302
    %381 = vmatprep.subr.bf16.mxu0 0
    %382 = vmatpush1.bf16.msra.mxu0 %v303
    %383 = vmatprep.subr.bf16.mxu0 0
    %384 = vmatpush1.bf16.msra.mxu0 %v304
    %385 = vmatprep.mubr.bf16.mxu0 %v154
    %386 = vmatmul.mubr.bf16.gmra.mrb[0].mxu0 %v153
    %v387 = vpop.f32.mrb[0].mxu0
    %v388 = vadd.f32 %v139, %v387
    %v389 = vpop.f32.mrb[0].mxu0
    %v390 = vpop.f32.mrb[0].mxu0
    %v391 = vadd.f32 %v139, %v390
    %v392 = vpop.f32.mrb[0].mxu0
    %393 = vdwg.mxu0
    %394 = vmatprep.subr.bf16.mxu0 0
    %395 = vmatpush1.bf16.msra.mxu0 %v305
    %396 = vmatprep.subr.bf16.mxu0 0
    %397 = vmatpush1.bf16.msra.mxu0 %v306
    %398 = vmatprep.subr.bf16.mxu0 0
    %399 = vmatpush1.bf16.msra.mxu0 %v307
    %400 = vmatprep.subr.bf16.mxu0 0
    %401 = vmatpush1.bf16.msra.mxu0 %v308
    %402 = vmatprep.subr.bf16.mxu0 0
    %403 = vmatpush1.bf16.msra.mxu0 %v309
    %404 = vmatprep.subr.bf16.mxu0 0
    %405 = vmatpush1.bf16.msra.mxu0 %v310
    %406 = vmatprep.subr.bf16.mxu0 0
    %407 = vmatpush1.bf16.msra.mxu0 %v311
    %408 = vmatprep.subr.bf16.mxu0 0
    %409 = vmatpush1.bf16.msra.mxu0 %v312
    %410 = vmatprep.subr.bf16.mxu0 0
    %411 = vmatpush1.bf16.msra.mxu0 %v313
    %412 = vmatprep.subr.bf16.mxu0 0
    %413 = vmatpush1.bf16.msra.mxu0 %v314
    %414 = vmatprep.subr.bf16.mxu0 0
    %415 = vmatpush1.bf16.msra.mxu0 %v315
    %416 = vmatprep.subr.bf16.mxu0 0
    %417 = vmatpush1.bf16.msra.mxu0 %v316
    %418 = vmatprep.subr.bf16.mxu0 0
    %419 = vmatpush1.bf16.msra.mxu0 %v317
    %420 = vmatprep.subr.bf16.mxu0 0
    %421 = vmatpush1.bf16.msra.mxu0 %v318
    %422 = vmatprep.subr.bf16.mxu0 0
    %423 = vmatpush1.bf16.msra.mxu0 %v319
    %424 = vmatprep.subr.bf16.mxu0 0
    %425 = vmatpush1.bf16.msra.mxu0 %v320
    %426 = vmatprep.mubr.bf16.mxu0 %v156
    %427 = vmatmul.mubr.bf16.gmra.mrb[0].mxu0 %v155
    %v428 = vpop.f32.mrb[0].mxu0
    %v429 = vadd.f32 %v388, %v428
    %v430 = vpop.f32.mrb[0].mxu0
    %v431 = vpop.f32.mrb[0].mxu0
    %v432 = vadd.f32 %v391, %v431
    %v433 = vpop.f32.mrb[0].mxu0
    %434 = vdwg.mxu0
    %v435 = vld [vmem:[#allocation7] sm:$0xff]
    %v436 = vld [vmem:[#allocation7 + $0x8] sm:$0xff]
    %v437 = vadd.f32 %v429, %v435
    %v438 = vadd.f32 %v432, %v436
    %439 = vadd.xlane.f32.xlu0 %v437
    %v440 = vpop.xlane.xlu0 %439
    %441 = vadd.xlane.f32.xlu0 %v438
    %v442 = vpop.xlane.xlu0 %441
    %v443 = vrcp.pop 128.0
    %v444 = vmul.f32 %v440, %v443
    %v445 = vmul.f32 %v442, %v443
    %v446 = vsub.f32 %v437, %v444
    %v447 = vsub.f32 %v438, %v445
    %v448 = vmul.f32 %v446, %v446
    %v449 = vmul.f32 %v447, %v447
    %450 = vadd.xlane.f32.xlu0 %v448
    %v451 = vpop.xlane.xlu0 %450
    %452 = vadd.xlane.f32.xlu0 %v449
    %v453 = vpop.xlane.xlu0 %452
    %v454 = vmul.f32 %v451, %v443
    %v455 = vmul.f32 %v453, %v443
    %v456 = vadd.f32 %v454, 1e-12
    %v457 = vadd.f32 %v455, 1e-12
    %v458 = vrsqrt.pop %v456
    %v459 = vrsqrt.pop %v457
    %v460 = vmul.f32 %v446, %v458
    %v461 = vmul.f32 %v447, %v459
    %v462 = vld [vmem:[%s4] sm:$0x1]
    %v464 = vlaneseq
    %v465 = vshrl.u32 %v464, 7
    %v466 = vsub.s32 0, %v465
    %v467 = vrot.slane %v462, %v466
    %v469 = vmul.f32 %v467, %v460
    %v470 = vmul.f32 %v467, %v461
    %v471 = vld [vmem:[%s5] sm:$0x1]
    %v473 = vlaneseq
    %v474 = vshrl.u32 %v473, 7
    %v475 = vsub.s32 0, %v474
    %v476 = vrot.slane %v471, %v475
    %v478 = vadd.f32 %v469, %v476
    %v479 = vadd.f32 %v470, %v476
    %480 = vst [vmem:[#allocation8] sm:$0xff] %v478
    %481 = vst [vmem:[#allocation8 + $0x8] sm:$0xff] %v479
    // Predicated region
    $region38: #{tpu_custom_call.1} parent=1 // pred_check
      _
    $region39: #{tpu_custom_call.1} parent=1 // pred_check_branch
      %483 = sbr.rel (0) target = $region41
    $region40: #{tpu_custom_call.1} parent=1 // pred_region
      %s485 = ssub.s32 256, 256
      %486 = vsyncadd [#allocation4], %s485
      %s487 = sshll.u32 [#allocation8], 4
      %s488 = int_to_ptr.vmem [resolvable:$true] %s487
      %493 = dma.vmem_to_hbm [thread:$0]  %s488, 256, %s6, [#allocation4], 128, 128, 8
    $region41: #{tpu_custom_call.1} parent=1 // pred_fallthru
      _
    // Predicated region
    $region42: #{tpu_custom_call.1} parent=1 // pred_check
      _
    $region43: #{tpu_custom_call.1} parent=1 // pred_check_branch
      %495 = sbr.rel (0) target = $region45
    $region44: #{tpu_custom_call.1} parent=1 // pred_region
      %496 = dma.done [#allocation4], 256
    $region45: #{tpu_custom_call.1} parent=1 // pred_fallthru
      _
    %497 = vsyncpa [#allocation3], 1
    %498 = vsyncpa [#allocation6], 1
    %499 = vsyncpa [#allocation4], 1

</llo_original>
